<compile_context>
chip_gen: v5e
topology: v5e:2x2
jax: 0.10.0
libtpu: 0.0.40
codegen_flags: <defaults>
</compile_context>

<pallas_src>
import functools

import jax
import jax.numpy as jnp
from jax.experimental import pallas as pl
from jax.experimental.pallas import tpu as pltpu


def _round_up(v, m):
    return ((v + m - 1) // m) * m


def _mlp_kernel(x_ref, w1_ref, b1_ref, w2_ref, b2_ref, o_ref):
    # bf16 casts happen here (VPU work, free under the DMA shadow).
    x = x_ref[...].astype(jnp.bfloat16)
    w1 = w1_ref[...].astype(jnp.bfloat16)
    # fc1 on the MXU: bf16 operands, f32 accumulation.
    h = jnp.dot(x, w1, preferred_element_type=jnp.float32)
    # Bias + ReLU in f32 on the accumulator (no bf16 VPU path on v5e).
    h = jnp.maximum(h + b1_ref[...], 0.0)
    # fc2: cast activations to bf16 only at the MXU boundary.
    w2 = w2_ref[...].astype(jnp.bfloat16)
    y = jnp.dot(h.astype(jnp.bfloat16), w2, preferred_element_type=jnp.float32)
    o_ref[...] = (y + b2_ref[...]).astype(o_ref.dtype)


@functools.partial(jax.jit, static_argnames=("tile_b",))
def reid_model_forward(x, w1, b1, w2, b2, *, tile_b=2048):
    """x: [B, in_dim]; w1: [in_dim, hid]; b1: [hid]; w2: [hid, out]; b2: [out].

    Weights are stored pre-transposed vs. PyTorch ([in, out]) so the kernel
    computes y = relu(x @ W1 + b1) @ W2 + b2 directly. Returns [B, out] f32.
    """
    B, in_dim = x.shape
    hid_dim, out_dim = w2.shape

    # Batch tile: large enough to amortize ~0.35us/grid-step, but small enough
    # that moderate batches still give >= 2 grid steps (v7x has 2 TCs).
    if B >= 2 * tile_b:
        tb = tile_b
    elif B >= 16:
        tb = _round_up((B + 1) // 2, 8)
    else:
        tb = max(8, _round_up(B, 8))
    n_tiles = (B + tb - 1) // tb

    b1r = b1.reshape(1, hid_dim).astype(jnp.float32)
    b2r = b2.reshape(1, out_dim).astype(jnp.float32)

    # Working set -> VMEM limit (never below the need, never above physical).
    f32, bf16 = 4, 2
    vmem_needed = (
        2 * tb * in_dim * f32                              # dbl-buffered x tiles
        + 2 * tb * out_dim * f32                           # dbl-buffered out tiles
        + 2 * (in_dim * hid_dim + hid_dim * out_dim
               + hid_dim + out_dim) * f32                  # resident W/b (dbl-buffered)
        + tb * (in_dim + hid_dim) * bf16                   # bf16 casts of x / h
        + tb * hid_dim * f32 + tb * out_dim * f32          # f32 intermediates
    )
    try:
        phys_vmem = int(getattr(pltpu.get_tpu_info(), "vmem_capacity_bytes",
                                64 << 20))
    except Exception:
        phys_vmem = 64 << 20                               # conservative (v7x per-TC)
    vmem_limit = max(vmem_needed + (4 << 20), 16 << 20)    # need + headroom
    vmem_limit = min(vmem_limit, phys_vmem - (8 << 20))    # stay under physical
    vmem_limit = int(max(vmem_limit, vmem_needed))         # cap trims headroom only

    cost = pl.CostEstimate(
        flops=2 * B * (in_dim * hid_dim + hid_dim * out_dim),
        transcendentals=0,
        bytes_accessed=(B * in_dim * 4
                        + (in_dim * hid_dim + hid_dim * out_dim) * 4
                        + (hid_dim + out_dim) * 4
                        + B * out_dim * 4),
    )

    return pl.pallas_call(
        _mlp_kernel,
        out_shape=jax.ShapeDtypeStruct((B, out_dim), jnp.float32),
        grid=(n_tiles,),
        in_specs=[
            pl.BlockSpec((tb, in_dim), lambda i: (i, 0)),        # x streams per tile
            pl.BlockSpec((in_dim, hid_dim), lambda i: (0, 0)),   # W1 resident
            pl.BlockSpec((1, hid_dim), lambda i: (0, 0)),        # b1 resident
            pl.BlockSpec((hid_dim, out_dim), lambda i: (0, 0)),  # W2 resident
            pl.BlockSpec((1, out_dim), lambda i: (0, 0)),        # b2 resident
        ],
        out_specs=pl.BlockSpec((tb, out_dim), lambda i: (i, 0)), # true-width store
        compiler_params=pltpu.CompilerParams(
            dimension_semantics=("parallel",),
            vmem_limit_bytes=vmem_limit,
        ),
        cost_estimate=cost,
    )(x, w1, b1r, w2, b2r)


def init_linear_params(key, in_dim, out_dim, dtype=jnp.float32):
    """Deterministic init mimicking nn.Linear (uniform +/- 1/sqrt(in_dim)).
    Weight is returned in [in_dim, out_dim] layout (transposed vs. PyTorch)."""
    kw, kb = jax.random.split(key)
    bound = 1.0 / jnp.sqrt(jnp.array(in_dim, dtype))
    w = jax.random.uniform(kw, (in_dim, out_dim), dtype, -bound, bound)
    b = jax.random.uniform(kb, (out_dim,), dtype, -bound, bound)
    return w, b


if __name__ == "__main__":
    # Small shapes consistent with the module's forward: x is [batch, input_dim].
    batch, input_dim, hidden_dim, output_dim = 8, 32, 64, 16

    key = jax.random.PRNGKey(0)
    kx, k1, k2 = jax.random.split(key, 3)

    x = jax.random.normal(kx, (batch, input_dim), jnp.float32)
    w1, b1 = init_linear_params(k1, input_dim, hidden_dim)
    w2, b2 = init_linear_params(k2, hidden_dim, output_dim)

    out = jax.block_until_ready(reid_model_forward(x, w1, b1, w2, b2))
    assert out.shape == (batch, output_dim)

    # Tight check vs. a reference emulating the kernel's bf16 MXU inputs
    # (f32 accumulation) — identical numerics up to accumulation order.
    q = lambda a: a.astype(jnp.bfloat16).astype(jnp.float32)
    h_ref = jnp.maximum(q(x) @ q(w1) + b1, 0.0)
    ref_q = q(h_ref) @ q(w2) + b2
    assert jnp.allclose(out, ref_q, atol=1e-3, rtol=1e-3)

    # Looser check vs. pure-f32 PyTorch semantics (bf16 MXU quantization).
    ref_f32 = jnp.maximum(x @ w1 + b1, 0.0) @ w2 + b2
    assert jnp.allclose(out, ref_f32, atol=5e-2, rtol=5e-2)

    # Ragged batch: exercises the unpadded-batch path with a partial boundary
    # block (OOB rows read harmlessly, OOB output writes dropped by Pallas).
    x2 = jax.random.normal(kx, (20, input_dim), jnp.float32)
    out2 = jax.block_until_ready(reid_model_forward(x2, w1, b1, w2, b2))
    h2 = jnp.maximum(q(x2) @ q(w1) + b1, 0.0)
    ref2 = q(h2) @ q(w2) + b2
    assert out2.shape == (20, output_dim)
    assert jnp.allclose(out2, ref2, atol=1e-3, rtol=1e-3)

    print("KERNEL_OK")
</pallas_src>

<mosaic_0001>
module attributes {stable_mosaic.version = 11 : i64} {
  func.func @_mlp_kernel(%arg0: i32, %arg1: memref<8x32xf32, #tpu.memory_space<vmem>>, %arg2: memref<32x64xf32, #tpu.memory_space<vmem>>, %arg3: memref<1x64xf32, #tpu.memory_space<vmem>>, %arg4: memref<64x16xf32, #tpu.memory_space<vmem>>, %arg5: memref<1x16xf32, #tpu.memory_space<vmem>>, %arg6: memref<8x16xf32, #tpu.memory_space<vmem>>) attributes {dimension_semantics = [#tpu.dimension_semantics<parallel>], iteration_bounds = array<i64: 1>, scalar_prefetch = 0 : i64, scratch_operands = 0 : i64, tpu.core_type = #tpu.core_type<tc>, window_params = [{transform_indices = @transform_0, window_bounds = array<i64: 8, 32>}, {pipeline_mode = #tpu.pipeline_mode<synchronous>, transform_indices = @transform_1, window_bounds = array<i64: 32, 64>}, {pipeline_mode = #tpu.pipeline_mode<synchronous>, transform_indices = @transform_2, window_bounds = array<i64: 1, 64>}, {pipeline_mode = #tpu.pipeline_mode<synchronous>, transform_indices = @transform_3, window_bounds = array<i64: 64, 16>}, {pipeline_mode = #tpu.pipeline_mode<synchronous>, transform_indices = @transform_4, window_bounds = array<i64: 1, 16>}, {transform_indices = @transform_5, window_bounds = array<i64: 8, 16>}]} {
    %c0 = arith.constant 0 : index
    %c0_0 = arith.constant 0 : index
    %0 = vector.load %arg1[%c0, %c0_0] : memref<8x32xf32, #tpu.memory_space<vmem>>, vector<8x32xf32>
    %1 = arith.truncf %0 : vector<8x32xf32> to vector<8x32xbf16>
    %c0_1 = arith.constant 0 : index
    %c0_2 = arith.constant 0 : index
    %2 = vector.load %arg2[%c0_1, %c0_2] : memref<32x64xf32, #tpu.memory_space<vmem>>, vector<32x64xf32>
    %3 = arith.truncf %2 : vector<32x64xf32> to vector<32x64xbf16>
    %cst = arith.constant dense<0.000000e+00> : vector<8x64xf32>
    %4 = tpu.matmul %1, %3, %cst {dimension_numbers = #tpu.dot_dimension_numbers<[1], [0], [0], [1], [0, 0, 1, 1], [], []>} : vector<8x32xbf16>, vector<32x64xbf16>, vector<8x64xf32> -> vector<8x64xf32>
    %c0_3 = arith.constant 0 : index
    %c0_4 = arith.constant 0 : index
    %5 = vector.load %arg3[%c0_3, %c0_4] : memref<1x64xf32, #tpu.memory_space<vmem>>, vector<1x64xf32>
    %6 = vector.broadcast %5 : vector<1x64xf32> to vector<8x64xf32>
    %7 = arith.addf %4, %6 : vector<8x64xf32>
    %cst_5 = arith.constant 0.000000e+00 : f32
    %8 = vector.broadcast %cst_5 : f32 to vector<8x64xf32>
    %9 = arith.maximumf %7, %8 : vector<8x64xf32>
    %c0_6 = arith.constant 0 : index
    %c0_7 = arith.constant 0 : index
    %10 = vector.load %arg4[%c0_6, %c0_7] : memref<64x16xf32, #tpu.memory_space<vmem>>, vector<64x16xf32>
    %11 = arith.truncf %10 : vector<64x16xf32> to vector<64x16xbf16>
    %12 = arith.truncf %9 : vector<8x64xf32> to vector<8x64xbf16>
    %cst_8 = arith.constant dense<0.000000e+00> : vector<8x16xf32>
    %13 = tpu.matmul %12, %11, %cst_8 {dimension_numbers = #tpu.dot_dimension_numbers<[1], [0], [0], [1], [0, 0, 1, 1], [], []>} : vector<8x64xbf16>, vector<64x16xbf16>, vector<8x16xf32> -> vector<8x16xf32>
    %c0_9 = arith.constant 0 : index
    %c0_10 = arith.constant 0 : index
    %14 = vector.load %arg5[%c0_9, %c0_10] : memref<1x16xf32, #tpu.memory_space<vmem>>, vector<1x16xf32>
    %15 = vector.broadcast %14 : vector<1x16xf32> to vector<8x16xf32>
    %16 = arith.addf %13, %15 : vector<8x16xf32>
    %c0_11 = arith.constant 0 : index
    %c0_12 = arith.constant 0 : index
    %17 = vector.load %arg6[%c0_11, %c0_12] : memref<8x16xf32, #tpu.memory_space<vmem>>, vector<8x16xf32>
    tpu.vector_store %arg6[%c0_11, %c0_12], %16 {strides = array<i32>} : memref<8x16xf32, #tpu.memory_space<vmem>>, vector<8x16xf32>,
    return
  }
  func.func @transform_0(%arg0: i32) -> (i32, i32) {
    %c0_i32 = arith.constant 0 : i32
    %c0_i32_0 = arith.constant 0 : i32
    return %arg0, %c0_i32 : i32, i32
  }
  func.func @transform_1(%arg0: i32) -> (i32, i32) {
    %c0_i32 = arith.constant 0 : i32
    %c0_i32_0 = arith.constant 0 : i32
    %c0_i32_1 = arith.constant 0 : i32
    return %c0_i32, %c0_i32_0 : i32, i32
  }
  func.func @transform_2(%arg0: i32) -> (i32, i32) {
    %c0_i32 = arith.constant 0 : i32
    %c0_i32_0 = arith.constant 0 : i32
    %c0_i32_1 = arith.constant 0 : i32
    return %c0_i32, %c0_i32_0 : i32, i32
  }
  func.func @transform_3(%arg0: i32) -> (i32, i32) {
    %c0_i32 = arith.constant 0 : i32
    %c0_i32_0 = arith.constant 0 : i32
    %c0_i32_1 = arith.constant 0 : i32
    return %c0_i32, %c0_i32_0 : i32, i32
  }
  func.func @transform_4(%arg0: i32) -> (i32, i32) {
    %c0_i32 = arith.constant 0 : i32
    %c0_i32_0 = arith.constant 0 : i32
    %c0_i32_1 = arith.constant 0 : i32
    return %c0_i32, %c0_i32_0 : i32, i32
  }
  func.func @transform_5(%arg0: i32) -> (i32, i32) {
    %c0_i32 = arith.constant 0 : i32
    %c0_i32_0 = arith.constant 0 : i32
    return %arg0, %c0_i32 : i32, i32
  }
}

</mosaic_0001>

<llo_original>
// kernel: reid_model_forward.1
$region0: #{reid_model_forward.1}
  #allocation0 [shape = 'u32[]', space=smem, size = 0x4, offset = 0x4, fixed_abs, tag = 'smem constant byte address 0x4 - core index']
  #allocation1 [shape = 'u32[72,128]{1,0:T(1,128)}', space=vmem, size = 0x9000, scoped, tag = 'internal scratch']
  %s0 = inlined_call_operand.vmem [shape: f32[8,32], index: 0, kind: input, shape index: {}]
  %s1 = inlined_call_operand.vmem [shape: f32[32,64], index: 1, kind: input, shape index: {}]
  %s2 = inlined_call_operand.vmem [shape: f32[1,64], index: 2, kind: input, shape index: {}]
  %s3 = inlined_call_operand.vmem [shape: f32[64,16], index: 3, kind: input, shape index: {}]
  %s4 = inlined_call_operand.vmem [shape: f32[1,16], index: 4, kind: input, shape index: {}]
  %s5 = inlined_call_operand.hbm [shape: f32[8,16], index: 5, kind: output, shape index: {}]
  %s6 = sld [smem:[#allocation0]]
  $region30: #{reid_model_forward.1} parent=0
    _
  %s8 = ssub.s32 1, %s6
  %s9 = scalar_select 0, %s8, %s6
  $region1: #{reid_model_forward.1} parent=0
    #allocation2 [shape = 'u8[4096]{0}', space=vmem, size = 0x1000, scoped, tag = 'output window, operand 0, single buffered']
    #allocation3 [shape = 's32[1]{0}', space=sflag, size = 0x4, scoped, tag = 'scoped memory for reid_model_forward.1']
    %10 = vsyncpa [#allocation3], 0
    // Predicated region
    $region2: #{reid_model_forward.1} parent=1 // pred_check
      _
    $region3: #{reid_model_forward.1} parent=1 // pred_check_branch
      %12 = sbr.rel (0) target = $region5
    $region4: #{reid_model_forward.1} parent=1 // pred_region
      _
    $region5: #{reid_model_forward.1} parent=1 // pred_fallthru
      _
    // Predicated region
    $region6: #{reid_model_forward.1} parent=1 // pred_check
      _
    $region7: #{reid_model_forward.1} parent=1 // pred_check_branch
      %14 = sbr.rel (0) target = $region9
    $region8: #{reid_model_forward.1} parent=1 // pred_region
      _
    $region9: #{reid_model_forward.1} parent=1 // pred_fallthru
      _
    // Predicated region
    $region10: #{reid_model_forward.1} parent=1 // pred_check
      _
    $region11: #{reid_model_forward.1} parent=1 // pred_check_branch
      %16 = sbr.rel (0) target = $region13
    $region12: #{reid_model_forward.1} parent=1 // pred_region
      _
    $region13: #{reid_model_forward.1} parent=1 // pred_fallthru
      _
    // Predicated region
    $region14: #{reid_model_forward.1} parent=1 // pred_check
      _
    $region15: #{reid_model_forward.1} parent=1 // pred_check_branch
      %18 = sbr.rel (0) target = $region17
    $region16: #{reid_model_forward.1} parent=1 // pred_region
      _
    $region17: #{reid_model_forward.1} parent=1 // pred_fallthru
      _
    // Predicated region
    $region18: #{reid_model_forward.1} parent=1 // pred_check
      _
    $region19: #{reid_model_forward.1} parent=1 // pred_check_branch
      %20 = sbr.rel (0) target = $region21
    $region20: #{reid_model_forward.1} parent=1 // pred_region
      _
    $region21: #{reid_model_forward.1} parent=1 // pred_fallthru
      _
    %v22 = vld [vmem:[%s0] sm:$0xff]
    %v23 = vpack.c.bf16 %v22, %v22
    %v24 = vld [vmem:[%s1] sm:$0xff]
    %v25 = vld [vmem:[%s1 + $0x8] sm:$0xff]
    %v26 = vld [vmem:[%s1 + $0x10] sm:$0xff]
    %v27 = vld [vmem:[%s1 + $0x18] sm:$0xff]
    %v28 = vpack.c.bf16 %v25, %v24
    %v29 = vpack.c.bf16 %v27, %v26
    %v30 = vld [vmem:[%s2] sm:$0x1]
    %v32 = vperm.slane %v30, 0
    %vm34 = vcmask 261120
    %v36 = vsel %vm34, %v23, 0
    %38 = vmatpush.bf16.msra.mxu0 0
    %39 = vmatpush.bf16.msra.mxu0 0
    %40 = vmatpush.bf16.msra.mxu0 0
    %41 = vmatpush.bf16.msra.mxu0 0
    %42 = vmatpush.bf16.msra.mxu0 0
    %43 = vmatpush.bf16.msra.mxu0 0
    %44 = vmatpush.bf16.msra.mxu0 %v29
    %45 = vmatpush.bf16.msra.mxu0 %v28
    %46 = vmatmul.bf16.gmra.mxu0 %v36
    %v47 = vpop.f32.mrf.mxu0
    %v48 = vadd.f32 %v32, %v47
    %v49 = vpop.f32.mrf.mxu0
    %50 = vdwg.mxu0
    %v51 = vmax.f32 %v48, 0.0
    %v52 = vld [vmem:[%s3] sm:$0xff]
    %v53 = vld [vmem:[%s3 + $0x8] sm:$0xff]
    %v54 = vld [vmem:[%s3 + $0x10] sm:$0xff]
    %v55 = vld [vmem:[%s3 + $0x18] sm:$0xff]
    %v56 = vld [vmem:[%s3 + $0x20] sm:$0xff]
    %v57 = vld [vmem:[%s3 + $0x28] sm:$0xff]
    %v58 = vld [vmem:[%s3 + $0x30] sm:$0xff]
    %v59 = vld [vmem:[%s3 + $0x38] sm:$0xff]
    %v60 = vpack.c.bf16 %v53, %v52
    %v61 = vpack.c.bf16 %v55, %v54
    %v62 = vpack.c.bf16 %v57, %v56
    %v63 = vpack.c.bf16 %v59, %v58
    %v64 = vpack.c.bf16 %v51, %v51
    %v65 = vld [vmem:[%s4] sm:$0x1]
    %v67 = vperm.slane %v65, 0
    %vm69 = vcmask 523264
    %v71 = vsel %vm69, %v64, 0
    %73 = vmatpush.bf16.msra.mxu0 0
    %74 = vmatpush.bf16.msra.mxu0 0
    %75 = vmatpush.bf16.msra.mxu0 0
    %76 = vmatpush.bf16.msra.mxu0 0
    %77 = vmatpush.bf16.msra.mxu0 %v63
    %78 = vmatpush.bf16.msra.mxu0 %v62
    %79 = vmatpush.bf16.msra.mxu0 %v61
    %80 = vmatpush.bf16.msra.mxu0 %v60
    %81 = vmatmul.bf16.gmra.mxu0 %v71
    %v82 = vpop.f32.mrf.mxu0
    %v83 = vadd.f32 %v67, %v82
    %v84 = vpop.f32.mrf.mxu0
    %85 = vdwg.mxu0
    %vm86 = vcmask 130048
    %87 = vst.msk [vmem:[#allocation2] sm:$0xff] %vm86, %v83
    // Predicated region
    $region22: #{reid_model_forward.1} parent=1 // pred_check
      _
    $region23: #{reid_model_forward.1} parent=1 // pred_check_branch
      %89 = sbr.rel (0) target = $region25
    $region24: #{reid_model_forward.1} parent=1 // pred_region
      %91 = vsyncadd [#allocation3], 0
      %s93 = sshll.u32 [#allocation2], 4
      %s94 = int_to_ptr.vmem [resolvable:$true] %s93
      %s95 = sshll.u32 %s5, 4
      %s96 = int_to_ptr.hbm [resolvable:$true] %s95
      %98 = dma.vmem_to_hbm [thread:$0]  %s94, 128, %s96, [#allocation3]
    $region25: #{reid_model_forward.1} parent=1 // pred_fallthru
      _
    // Predicated region
    $region26: #{reid_model_forward.1} parent=1 // pred_check
      _
    $region27: #{reid_model_forward.1} parent=1 // pred_check_branch
      %100 = sbr.rel (0) target = $region29
    $region28: #{reid_model_forward.1} parent=1 // pred_region
      %102 = dma.done [#allocation3], 128
    $region29: #{reid_model_forward.1} parent=1 // pred_fallthru
      _
    %103 = vsyncpa [#allocation3], 1

</llo_original>
